<compile_context>
chip_gen: v6e
topology: v6e:2x2x1
jax: 0.10.0
libtpu: 0.0.40
codegen_flags: <defaults>
</compile_context>

<pallas_src>
import functools

import jax
import jax.numpy as jnp
from jax.experimental import pallas as pl
from jax.experimental.pallas import tpu as pltpu


def _edge_aware_kernel(ninv_ref, img_ref, guide_ref, out_ref,
                       carry_img_ref, carry_guide_ref, acc_ref,
                       *, n_h, valid_last):
    h = pl.program_id(1)
    c_img = img_ref.shape[1]
    c_guide = guide_ref.shape[1]
    tile_h = img_ref.shape[2]

    # Grayscale: single block read + channel reduction (mean over axis C), all math in f32.
    img_gray = jnp.sum(img_ref[0].astype(jnp.float32), axis=0) * (1.0 / c_img)
    guide_gray = jnp.sum(guide_ref[0].astype(jnp.float32), axis=0) * (1.0 / c_guide)

    # Hoisted scalar: -1 / (|gamma| + 1e-8), computed once in the wrapper, read from SMEM.
    neg_inv = ninv_ref[0]

    @pl.when(h == 0)
    def _():
        # First H tile of this image: zero the per-image accumulator and seed the carry
        # with this tile's own first row so the boundary dy term below is exactly zero.
        acc_ref[...] = jnp.zeros_like(acc_ref)
        carry_img_ref[...] = img_gray[0:1, :]
        carry_guide_ref[...] = guide_gray[0:1, :]

    # Single-vreg lane selector used once per step to fold (sum_x, sum_y) into lanes 0/1.
    lane = jax.lax.broadcasted_iota(jnp.int32, (1, 128), 1)

    def accumulate_tile(ig, gg):
        rows, cols = ig.shape
        sum_x = jnp.float32(0.0)
        sum_y = jnp.float32(0.0)
        if cols >= 2:
            # dx along W (within rows).
            dx_i = ig[:, 1:] - ig[:, :-1]
            dx_g = gg[:, 1:] - gg[:, :-1]
            sum_x = jnp.sum(jnp.exp(jnp.abs(dx_g) * neg_inv) * jnp.abs(dx_i))
        if rows >= 2:
            # dy along H: pairs fully inside this tile.
            dy_i = ig[1:, :] - ig[:-1, :]
            dy_g = gg[1:, :] - gg[:-1, :]
            sum_y = jnp.sum(jnp.exp(jnp.abs(dy_g) * neg_inv) * jnp.abs(dy_i))
        # dy pair straddling the tile boundary: first row of this tile vs. the carried
        # last row of the previous tile (zero by construction when h == 0).
        b_i = ig[0:1, :] - carry_img_ref[...]
        b_g = gg[0:1, :] - carry_guide_ref[...]
        sum_y = sum_y + jnp.sum(jnp.exp(jnp.abs(b_g) * neg_inv) * jnp.abs(b_i))
        acc_ref[...] = acc_ref[...] + jnp.where(
            lane == 0, sum_x, jnp.where(lane == 1, sum_y, 0.0))

    if valid_last == tile_h:
        # H divides evenly into tiles (or single tile): one unmasked path for every step.
        accumulate_tile(img_gray, guide_gray)
    else:
        last = n_h - 1

        @pl.when(h != last)
        def _():
            # Interior tiles: fully valid, no masking whatsoever.
            accumulate_tile(img_gray, guide_gray)

        @pl.when(h == last)
        def _():
            # Ragged last tile: only `valid_last` rows exist in the image.  Static slice,
            # so padded/undefined rows never enter any reduction (no iota / select needed).
            accumulate_tile(img_gray[:valid_last, :], guide_gray[:valid_last, :])

    # Carry this tile's last grayscale row to the next H tile of the same image
    # (irrelevant for the last tile: the next grid step re-seeds at h == 0).
    carry_img_ref[...] = img_gray[tile_h - 1:tile_h, :]
    carry_guide_ref[...] = guide_gray[tile_h - 1:tile_h, :]

    # Write the lane-dense per-image partial sums exactly once, at the last H tile.
    @pl.when(h == n_h - 1)
    def _():
        out_ref[0] = acc_ref[...]


def _vmem_budget_bytes():
    """(work budget for tile sizing, explicit vmem_limit_bytes) per chip generation."""
    kind = ""
    try:
        kind = jax.devices()[0].device_kind.lower()
    except Exception:
        pass
    if "v7" in kind:
        # v7x: only 64 MiB physical VMEM per TensorCore -> stay well under it.
        return 36 << 20, 48 << 20
    # v5e / v6e (and other generations with 128 MiB physical VMEM).
    return 64 << 20, 96 << 20


def edge_aware_smoothing_loss(img, guide_img, gamma, *, tile_h=None):
    """JAX/Pallas equivalent of EdgeAwareSmoothingLoss.forward.

    img:       (B, C_img, H, W) float
    guide_img: (B, C_guide, H, W) float (same B, H, W)
    gamma:     scalar float32 (the learnable parameter)
    returns:   scalar float32 loss
    """
    B, C_img, H, W = img.shape
    Bg, C_guide, Hg, Wg = guide_img.shape
    assert (B, H, W) == (Bg, Hg, Wg), "img / guide must share batch and spatial dims"

    itemsize = jnp.dtype(img.dtype).itemsize
    g_itemsize = jnp.dtype(guide_img.dtype).itemsize
    # Dtype-aware sublane multiple: 8 for 4-byte, 16 for 2-byte, 32 for 1-byte dtypes.
    sublane = max(8, 32 // min(itemsize, g_itemsize))
    w_pad = -(-W // 128) * 128          # lane padding counted in the byte budget
    work_budget, vmem_limit = _vmem_budget_bytes()

    if tile_h is None:
        # Per H-row VMEM cost: 2 pipeline buffers per input tile (with lane padding) plus
        # ~8 gray-tile-sized f32 intermediates (grayscale, shifted slices, |d|, weights,
        # products -- slices are copies, not views).
        per_row = w_pad * (2 * (C_img * itemsize + C_guide * g_itemsize) + 8 * 4)
        tile_h = max(sublane, work_budget // max(1, per_row))
    tile_h = int(tile_h)
    if tile_h >= H:
        tile_h = H                       # single tile; full-dim block is always legal
    else:
        tile_h = max(sublane, (tile_h // sublane) * sublane)
        tile_h = min(tile_h, H)
    n_h = -(-H // tile_h)
    valid_last = H - (n_h - 1) * tile_h  # static number of valid rows in the last tile

    # Hoist the per-element divide out of the kernel: pass -1/(|gamma|+1e-8) via SMEM.
    neg_inv_gamma = jnp.reshape(
        -1.0 / (jnp.abs(jnp.asarray(gamma, dtype=jnp.float32)) + 1e-8), (1,))

    kernel = functools.partial(_edge_aware_kernel, n_h=n_h, valid_last=valid_last)

    cost = pl.CostEstimate(
        flops=int(B * H * W * (C_img + C_guide + 12)),
        transcendentals=int(2 * B * H * W),
        bytes_accessed=int(img.size * itemsize + guide_img.size * g_itemsize
                           + B * 128 * 4),
    )

    partial_sums = pl.pallas_call(
        kernel,
        out_shape=jax.ShapeDtypeStruct((B, 1, 128), jnp.float32),
        grid=(B, n_h),
        in_specs=[
            pl.BlockSpec(memory_space=pltpu.MemorySpace.SMEM),                 # -1/(|g|+eps)
            pl.BlockSpec((1, C_img, tile_h, W), lambda b, h: (b, 0, h, 0)),    # img tile
            pl.BlockSpec((1, C_guide, tile_h, W), lambda b, h: (b, 0, h, 0)),  # guide tile
        ],
        out_specs=pl.BlockSpec((1, 1, 128), lambda b, h: (b, 0, 0)),
        scratch_shapes=[
            pltpu.VMEM((1, W), jnp.float32),    # carried last gray row of img
            pltpu.VMEM((1, W), jnp.float32),    # carried last gray row of guide
            pltpu.VMEM((1, 128), jnp.float32),  # per-image (sum_x, sum_y) accumulator
        ],
        compiler_params=pltpu.CompilerParams(
            dimension_semantics=("parallel", "arbitrary"),
            vmem_limit_bytes=int(vmem_limit)),
        cost_estimate=cost,
    )(neg_inv_gamma, img, guide_img)

    # Combine per-image partial sums and divide by the exact element counts
    # (sum-then-divide; identical to the torch means over the full dx/dy tensors).
    # Note: H == 1 or W == 1 yields NaN here, exactly like torch.mean of an empty tensor.
    sum_x = jnp.sum(partial_sums[:, 0, 0])
    sum_y = jnp.sum(partial_sums[:, 0, 1])
    loss_x = sum_x / float(B * H * (W - 1))
    loss_y = sum_y / float(B * (H - 1) * W)
    return loss_x + loss_y


def _reference(img, guide_img, gamma):
    """Pure-JAX reference mirroring the PyTorch module."""
    img_gray = jnp.mean(img, axis=1, keepdims=True) if img.shape[1] > 1 else img
    guide_gray = (jnp.mean(guide_img, axis=1, keepdims=True)
                  if guide_img.shape[1] > 1 else guide_img)
    dx_img = img_gray[:, :, :, 1:] - img_gray[:, :, :, :-1]
    dy_img = img_gray[:, :, 1:, :] - img_gray[:, :, :-1, :]
    dx_guide = guide_gray[:, :, :, 1:] - guide_gray[:, :, :, :-1]
    dy_guide = guide_gray[:, :, 1:, :] - guide_gray[:, :, :-1, :]
    wx = jnp.exp(-jnp.abs(dx_guide) / (jnp.abs(gamma) + 1e-8))
    wy = jnp.exp(-jnp.abs(dy_guide) / (jnp.abs(gamma) + 1e-8))
    return jnp.mean(wx * jnp.abs(dx_img)) + jnp.mean(wy * jnp.abs(dy_img))


if __name__ == "__main__":
    # Deterministic parameter init (module __init__: gamma = 0.1 scalar).
    gamma = jnp.asarray(0.1, dtype=jnp.float32)

    key = jax.random.PRNGKey(0)
    k1, k2, k3, k4, k5, k6 = jax.random.split(key, 6)

    # Case 1: multi-channel img & guide; tile_h=8 < H=16 exercises the cross-tile
    # dy carry and the per-image accumulator across H tiles (evenly divided H).
    img1 = jax.random.normal(k1, (2, 4, 16, 16), dtype=jnp.float32)
    gid1 = jax.random.normal(k2, (2, 4, 16, 16), dtype=jnp.float32)
    out1 = jax.block_until_ready(edge_aware_smoothing_loss(img1, gid1, gamma, tile_h=8))
    ref1 = jax.block_until_ready(_reference(img1, gid1, gamma))
    assert jnp.allclose(out1, ref1, rtol=1e-4, atol=1e-6), (out1, ref1)

    # Case 2: single-channel guide and H not a multiple of tile_h -> C==1 path and the
    # statically-sliced ragged last tile (valid_last=4).
    img2 = jax.random.normal(k3, (2, 3, 20, 16), dtype=jnp.float32)
    gid2 = jax.random.normal(k4, (2, 1, 20, 16), dtype=jnp.float32)
    out2 = jax.block_until_ready(edge_aware_smoothing_loss(img2, gid2, gamma, tile_h=8))
    ref2 = jax.block_until_ready(_reference(img2, gid2, gamma))
    assert jnp.allclose(out2, ref2, rtol=1e-4, atol=1e-6), (out2, ref2)

    # Case 3: valid_last == 1 edge case (last tile has a single valid row, so its in-tile
    # dy term vanishes and only the carried boundary pair contributes).
    img3 = jax.random.normal(k5, (1, 3, 17, 16), dtype=jnp.float32)
    gid3 = jax.random.normal(k6, (1, 1, 17, 16), dtype=jnp.float32)
    out3 = jax.block_until_ready(edge_aware_smoothing_loss(img3, gid3, gamma, tile_h=8))
    ref3 = jax.block_until_ready(_reference(img3, gid3, gamma))
    assert jnp.allclose(out3, ref3, rtol=1e-4, atol=1e-6), (out3, ref3)

    # Case 4: automatic tile sizing (VMEM-budget path) -> single full-H tile at this size.
    out4 = jax.block_until_ready(edge_aware_smoothing_loss(img1, gid1, gamma))
    assert jnp.allclose(out4, ref1, rtol=1e-4, atol=1e-6), (out4, ref1)

    print("KERNEL_OK")
</pallas_src>

<mosaic_0001>
module attributes {stable_mosaic.version = 11 : i64} {
  func.func @_edge_aware_kernel(%arg0: i32, %arg1: i32, %arg2: memref<1xf32, #tpu.memory_space<smem>>, %arg3: memref<1x4x8x16xf32, #tpu.memory_space<vmem>>, %arg4: memref<1x4x8x16xf32, #tpu.memory_space<vmem>>, %arg5: memref<1x1x128xf32, #tpu.memory_space<vmem>>, %arg6: memref<1x16xf32, #tpu.memory_space<vmem>>, %arg7: memref<1x16xf32, #tpu.memory_space<vmem>>, %arg8: memref<1x128xf32, #tpu.memory_space<vmem>>) attributes {dimension_semantics = [#tpu.dimension_semantics<parallel>, #tpu.dimension_semantics<arbitrary>], iteration_bounds = array<i64: 2, 2>, scalar_prefetch = 0 : i64, scratch_operands = 3 : i64, tpu.core_type = #tpu.core_type<tc>, window_params = [{transform_indices = @transform_0, window_bounds = array<i64: 1>}, {transform_indices = @transform_1, window_bounds = array<i64: 1, 4, 8, 16>}, {transform_indices = @transform_2, window_bounds = array<i64: 1, 4, 8, 16>}, {transform_indices = @transform_3, window_bounds = array<i64: 1, 1, 128>}]} {
    %c0 = arith.constant 0 : index
    %c0_0 = arith.constant 0 : index
    %c0_1 = arith.constant 0 : index
    %c0_2 = arith.constant 0 : index
    %0 = vector.load %arg3[%c0, %c0_0, %c0_1, %c0_2] : memref<1x4x8x16xf32, #tpu.memory_space<vmem>>, vector<1x4x8x16xf32>
    %1 = vector.shape_cast %0 : vector<1x4x8x16xf32> to vector<4x8x16xf32>
    %cst = arith.constant dense<0.000000e+00> : vector<8x16xf32>
    %2 = vector.multi_reduction <add>, %1, %cst [0] : vector<4x8x16xf32> to vector<8x16xf32>
    %cst_3 = arith.constant 2.500000e-01 : f32
    %3 = vector.broadcast %cst_3 : f32 to vector<8x16xf32>
    %4 = arith.mulf %2, %3 : vector<8x16xf32>
    %c0_4 = arith.constant 0 : index
    %c0_5 = arith.constant 0 : index
    %c0_6 = arith.constant 0 : index
    %c0_7 = arith.constant 0 : index
    %5 = vector.load %arg4[%c0_4, %c0_5, %c0_6, %c0_7] : memref<1x4x8x16xf32, #tpu.memory_space<vmem>>, vector<1x4x8x16xf32>
    %6 = vector.shape_cast %5 : vector<1x4x8x16xf32> to vector<4x8x16xf32>
    %cst_8 = arith.constant dense<0.000000e+00> : vector<8x16xf32>
    %7 = vector.multi_reduction <add>, %6, %cst_8 [0] : vector<4x8x16xf32> to vector<8x16xf32>
    %cst_9 = arith.constant 2.500000e-01 : f32
    %8 = vector.broadcast %cst_9 : f32 to vector<8x16xf32>
    %9 = arith.mulf %7, %8 : vector<8x16xf32>
    %c0_10 = arith.constant 0 : index
    %10 = memref.load %arg2[%c0_10] : memref<1xf32, #tpu.memory_space<smem>>
    %c0_i32 = arith.constant 0 : i32
    %11 = arith.cmpi eq, %arg1, %c0_i32 : i32
    %12 = arith.extui %11 : i1 to i32
    %c0_i32_11 = arith.constant 0 : i32
    %13 = arith.cmpi ne, %12, %c0_i32_11 : i32
    scf.if %13 {
      %cst_31 = arith.constant 0.000000e+00 : f32
      %83 = vector.broadcast %cst_31 : f32 to vector<1x128xf32>
      %c0_32 = arith.constant 0 : index
      %c0_33 = arith.constant 0 : index
      %84 = vector.load %arg8[%c0_32, %c0_33] : memref<1x128xf32, #tpu.memory_space<vmem>>, vector<1x128xf32>
      tpu.vector_store %arg8[%c0_32, %c0_33], %83 {strides = array<i32>} : memref<1x128xf32, #tpu.memory_space<vmem>>, vector<1x128xf32>,
      %85 = vector.extract_strided_slice %4 {offsets = [0, 0], sizes = [1, 16], strides = [1, 1]} : vector<8x16xf32> to vector<1x16xf32>
      %c0_34 = arith.constant 0 : index
      %c0_35 = arith.constant 0 : index
      %86 = vector.load %arg6[%c0_34, %c0_35] : memref<1x16xf32, #tpu.memory_space<vmem>>, vector<1x16xf32>
      tpu.vector_store %arg6[%c0_34, %c0_35], %85 {strides = array<i32>} : memref<1x16xf32, #tpu.memory_space<vmem>>, vector<1x16xf32>,
      %87 = vector.extract_strided_slice %9 {offsets = [0, 0], sizes = [1, 16], strides = [1, 1]} : vector<8x16xf32> to vector<1x16xf32>
      %c0_36 = arith.constant 0 : index
      %c0_37 = arith.constant 0 : index
      %88 = vector.load %arg7[%c0_36, %c0_37] : memref<1x16xf32, #tpu.memory_space<vmem>>, vector<1x16xf32>
      tpu.vector_store %arg7[%c0_36, %c0_37], %87 {strides = array<i32>} : memref<1x16xf32, #tpu.memory_space<vmem>>, vector<1x16xf32>,
    } else {
    }
    %14 = tpu.iota {dimensions = array<i32: 1>} : vector<1x128xi32>
    %15 = vector.extract_strided_slice %4 {offsets = [0, 1], sizes = [8, 15], strides = [1, 1]} : vector<8x16xf32> to vector<8x15xf32>
    %16 = vector.extract_strided_slice %4 {offsets = [0, 0], sizes = [8, 15], strides = [1, 1]} : vector<8x16xf32> to vector<8x15xf32>
    %17 = arith.subf %15, %16 : vector<8x15xf32>
    %18 = vector.extract_strided_slice %9 {offsets = [0, 1], sizes = [8, 15], strides = [1, 1]} : vector<8x16xf32> to vector<8x15xf32>
    %19 = vector.extract_strided_slice %9 {offsets = [0, 0], sizes = [8, 15], strides = [1, 1]} : vector<8x16xf32> to vector<8x15xf32>
    %20 = arith.subf %18, %19 : vector<8x15xf32>
    %21 = math.absf %20 : vector<8x15xf32>
    %22 = vector.broadcast %10 : f32 to vector<8x15xf32>
    %23 = arith.mulf %21, %22 : vector<8x15xf32>
    %24 = math.exp %23 : vector<8x15xf32>
    %25 = math.absf %17 : vector<8x15xf32>
    %26 = arith.mulf %24, %25 : vector<8x15xf32>
    %27 = vector.shape_cast %26 : vector<8x15xf32> to vector<1x8x15xf32>
    %cst_12 = arith.constant dense<0.000000e+00> : vector<1xf32>
    %28 = vector.multi_reduction <add>, %27, %cst_12 [1, 2] : vector<1x8x15xf32> to vector<1xf32>
    %29 = vector.shape_cast %28 : vector<1xf32> to vector<1x1x1xf32>
    %30 = vector.extract %29[0, 0, 0] : f32 from vector<1x1x1xf32>
    %31 = vector.extract_strided_slice %4 {offsets = [1, 0], sizes = [7, 16], strides = [1, 1]} : vector<8x16xf32> to vector<7x16xf32>
    %32 = vector.extract_strided_slice %4 {offsets = [0, 0], sizes = [7, 16], strides = [1, 1]} : vector<8x16xf32> to vector<7x16xf32>
    %33 = arith.subf %31, %32 : vector<7x16xf32>
    %34 = vector.extract_strided_slice %9 {offsets = [1, 0], sizes = [7, 16], strides = [1, 1]} : vector<8x16xf32> to vector<7x16xf32>
    %35 = vector.extract_strided_slice %9 {offsets = [0, 0], sizes = [7, 16], strides = [1, 1]} : vector<8x16xf32> to vector<7x16xf32>
    %36 = arith.subf %34, %35 : vector<7x16xf32>
    %37 = math.absf %36 : vector<7x16xf32>
    %38 = vector.broadcast %10 : f32 to vector<7x16xf32>
    %39 = arith.mulf %37, %38 : vector<7x16xf32>
    %40 = math.exp %39 : vector<7x16xf32>
    %41 = math.absf %33 : vector<7x16xf32>
    %42 = arith.mulf %40, %41 : vector<7x16xf32>
    %43 = vector.shape_cast %42 : vector<7x16xf32> to vector<1x7x16xf32>
    %cst_13 = arith.constant dense<0.000000e+00> : vector<1xf32>
    %44 = vector.multi_reduction <add>, %43, %cst_13 [1, 2] : vector<1x7x16xf32> to vector<1xf32>
    %45 = vector.shape_cast %44 : vector<1xf32> to vector<1x1x1xf32>
    %46 = vector.extract %45[0, 0, 0] : f32 from vector<1x1x1xf32>
    %47 = vector.extract_strided_slice %4 {offsets = [0, 0], sizes = [1, 16], strides = [1, 1]} : vector<8x16xf32> to vector<1x16xf32>
    %c0_14 = arith.constant 0 : index
    %c0_15 = arith.constant 0 : index
    %48 = vector.load %arg6[%c0_14, %c0_15] : memref<1x16xf32, #tpu.memory_space<vmem>>, vector<1x16xf32>
    %49 = arith.subf %47, %48 : vector<1x16xf32>
    %50 = vector.extract_strided_slice %9 {offsets = [0, 0], sizes = [1, 16], strides = [1, 1]} : vector<8x16xf32> to vector<1x16xf32>
    %c0_16 = arith.constant 0 : index
    %c0_17 = arith.constant 0 : index
    %51 = vector.load %arg7[%c0_16, %c0_17] : memref<1x16xf32, #tpu.memory_space<vmem>>, vector<1x16xf32>
    %52 = arith.subf %50, %51 : vector<1x16xf32>
    %53 = math.absf %52 : vector<1x16xf32>
    %54 = vector.broadcast %10 : f32 to vector<1x16xf32>
    %55 = arith.mulf %53, %54 : vector<1x16xf32>
    %56 = math.exp %55 : vector<1x16xf32>
    %57 = math.absf %49 : vector<1x16xf32>
    %58 = arith.mulf %56, %57 : vector<1x16xf32>
    %59 = vector.shape_cast %58 : vector<1x16xf32> to vector<1x1x16xf32>
    %cst_18 = arith.constant dense<0.000000e+00> : vector<1xf32>
    %60 = vector.multi_reduction <add>, %59, %cst_18 [1, 2] : vector<1x1x16xf32> to vector<1xf32>
    %61 = vector.shape_cast %60 : vector<1xf32> to vector<1x1x1xf32>
    %62 = vector.extract %61[0, 0, 0] : f32 from vector<1x1x1xf32>
    %63 = arith.addf %46, %62 : f32
    %c0_19 = arith.constant 0 : index
    %c0_20 = arith.constant 0 : index
    %64 = vector.load %arg8[%c0_19, %c0_20] : memref<1x128xf32, #tpu.memory_space<vmem>>, vector<1x128xf32>
    %c0_i32_21 = arith.constant 0 : i32
    %65 = vector.broadcast %c0_i32_21 : i32 to vector<1x128xi32>
    %66 = arith.cmpi eq, %14, %65 : vector<1x128xi32>
    %c1_i32 = arith.constant 1 : i32
    %67 = vector.broadcast %c1_i32 : i32 to vector<1x128xi32>
    %68 = arith.cmpi eq, %14, %67 : vector<1x128xi32>
    %cst_22 = arith.constant 0.000000e+00 : f32
    %69 = vector.broadcast %63 : f32 to vector<1x128xf32>
    %70 = vector.broadcast %cst_22 : f32 to vector<1x128xf32>
    %71 = arith.select %68, %69, %70 : vector<1x128xi1>, vector<1x128xf32>
    %72 = vector.broadcast %30 : f32 to vector<1x128xf32>
    %73 = arith.select %66, %72, %71 : vector<1x128xi1>, vector<1x128xf32>
    %74 = arith.addf %64, %73 : vector<1x128xf32>
    %c0_23 = arith.constant 0 : index
    %c0_24 = arith.constant 0 : index
    %75 = vector.load %arg8[%c0_23, %c0_24] : memref<1x128xf32, #tpu.memory_space<vmem>>, vector<1x128xf32>
    tpu.vector_store %arg8[%c0_23, %c0_24], %74 {strides = array<i32>} : memref<1x128xf32, #tpu.memory_space<vmem>>, vector<1x128xf32>,
    %76 = vector.extract_strided_slice %4 {offsets = [7, 0], sizes = [1, 16], strides = [1, 1]} : vector<8x16xf32> to vector<1x16xf32>
    %c0_25 = arith.constant 0 : index
    %c0_26 = arith.constant 0 : index
    %77 = vector.load %arg6[%c0_25, %c0_26] : memref<1x16xf32, #tpu.memory_space<vmem>>, vector<1x16xf32>
    tpu.vector_store %arg6[%c0_25, %c0_26], %76 {strides = array<i32>} : memref<1x16xf32, #tpu.memory_space<vmem>>, vector<1x16xf32>,
    %78 = vector.extract_strided_slice %9 {offsets = [7, 0], sizes = [1, 16], strides = [1, 1]} : vector<8x16xf32> to vector<1x16xf32>
    %c0_27 = arith.constant 0 : index
    %c0_28 = arith.constant 0 : index
    %79 = vector.load %arg7[%c0_27, %c0_28] : memref<1x16xf32, #tpu.memory_space<vmem>>, vector<1x16xf32>
    tpu.vector_store %arg7[%c0_27, %c0_28], %78 {strides = array<i32>} : memref<1x16xf32, #tpu.memory_space<vmem>>, vector<1x16xf32>,
    %c1_i32_29 = arith.constant 1 : i32
    %80 = arith.cmpi eq, %arg1, %c1_i32_29 : i32
    %81 = arith.extui %80 : i1 to i32
    %c0_i32_30 = arith.constant 0 : i32
    %82 = arith.cmpi ne, %81, %c0_i32_30 : i32
    scf.if %82 {
      %c0_31 = arith.constant 0 : index
      %c0_32 = arith.constant 0 : index
      %83 = vector.load %arg8[%c0_31, %c0_32] : memref<1x128xf32, #tpu.memory_space<vmem>>, vector<1x128xf32>
      %c0_33 = arith.constant 0 : index
      %c0_34 = arith.constant 0 : index
      %c0_35 = arith.constant 0 : index
      %84 = vector.load %arg5[%c0_33, %c0_34, %c0_35] : memref<1x1x128xf32, #tpu.memory_space<vmem>>, vector<1x1x128xf32>
      %85 = vector.shape_cast %84 : vector<1x1x128xf32> to vector<1x128xf32>
      %86 = vector.shape_cast %83 : vector<1x128xf32> to vector<1x1x128xf32>
      tpu.vector_store %arg5[%c0_33, %c0_34, %c0_35], %86 {strides = array<i32>} : memref<1x1x128xf32, #tpu.memory_space<vmem>>, vector<1x1x128xf32>,
    } else {
    }
    return
  }
  func.func @transform_0(%arg0: i32, %arg1: i32) -> i32 {
    %c0_i32 = arith.constant 0 : i32
    %c0_i32_0 = arith.constant 0 : i32
    return %c0_i32 : i32
  }
  func.func @transform_1(%arg0: i32, %arg1: i32) -> (i32, i32, i32, i32) {
    %c0_i32 = arith.constant 0 : i32
    %c0_i32_0 = arith.constant 0 : i32
    %c0_i32_1 = arith.constant 0 : i32
    return %arg0, %c0_i32, %arg1, %c0_i32_0 : i32, i32, i32, i32
  }
  func.func @transform_2(%arg0: i32, %arg1: i32) -> (i32, i32, i32, i32) {
    %c0_i32 = arith.constant 0 : i32
    %c0_i32_0 = arith.constant 0 : i32
    %c0_i32_1 = arith.constant 0 : i32
    return %arg0, %c0_i32, %arg1, %c0_i32_0 : i32, i32, i32, i32
  }
  func.func @transform_3(%arg0: i32, %arg1: i32) -> (i32, i32, i32) {
    %c0_i32 = arith.constant 0 : i32
    %c0_i32_0 = arith.constant 0 : i32
    %c0_i32_1 = arith.constant 0 : i32
    return %arg0, %c0_i32, %c0_i32_0 : i32, i32, i32
  }
}

</mosaic_0001>

<llo_original>
// kernel: tpu_custom_call.1
$region0: #{tpu_custom_call.1}
  #allocation0 [shape = 'u32[]', space=smem, size = 0x4, offset = 0x4, fixed_abs, tag = 'smem constant byte address 0x4 - core index']
  #allocation1 [shape = 'u32[144,128]{1,0:T(1,128)}', space=vmem, size = 0x12000, scoped, tag = 'internal scratch']
  #allocation2 [shape = 'f32[1,16]{1,0:T(1,128)}', space=vmem, size = 0x200, scoped, tag = 'scratch operand']
  #allocation3 [shape = 'f32[1,16]{1,0:T(1,128)}', space=vmem, size = 0x200, scoped, tag = 'scratch operand']
  #allocation4 [shape = 'f32[1,128]{1,0:T(1,128)}', space=vmem, size = 0x200, scoped, tag = 'scratch operand']
  #allocation5 [shape = 'f32[1]{0:T(128)S(6)}', space=smem, size = 0x200, scoped, tag = 'scoped memory for tpu_custom_call.1']
  %s0 = inlined_call_operand.<no memory space> [shape: f32[1], index: 0, kind: input, shape index: {}]
  %s1 = inlined_call_operand.hbm [shape: f32[2,4,16,16], index: 1, kind: input, shape index: {}]
  %s2 = inlined_call_operand.hbm [shape: f32[2,4,16,16], index: 2, kind: input, shape index: {}]
  %s3 = inlined_call_operand.hbm [shape: f32[2,1,128], index: 3, kind: output, shape index: {}]
  %s4 = sld [smem:[#allocation0]]
  $region61: #{tpu_custom_call.1} parent=0
    _
  %s6 = ssub.s32 1, %s4
  %s7 = scalar_select 0, %s6, %s4
  %8 = sst [smem:[#allocation5]] %s0
  $region1: #{tpu_custom_call.1} parent=0
    #allocation6 [shape = 'u8[32768]{0}', space=vmem, size = 0x8000, scoped, tag = 'input window, operand 1']
    #allocation7 [shape = 's32[2]{0}', space=sflag, size = 0x8, scoped, tag = 'scoped memory for tpu_custom_call.1']
    #allocation8 [shape = 's32[2]{0}', space=sflag, size = 0x8, scoped, tag = 'scoped memory for tpu_custom_call.1']
    #allocation9 [shape = 'u8[32768]{0}', space=vmem, size = 0x8000, scoped, tag = 'input window, operand 2']
    #allocation10 [shape = 's32[2]{0}', space=sflag, size = 0x8, scoped, tag = 'scoped memory for tpu_custom_call.1']
    #allocation11 [shape = 'u8[1024]{0}', space=vmem, size = 0x400, scoped, tag = 'output window, operand 0']
    %9 = vsyncpa [#allocation7], 0
    %s10 = scalar_lea.sflag [#allocation7], 1
    %11 = vsyncpa %s10, 0
    %12 = vsyncpa [#allocation10], 0
    %s13 = scalar_lea.sflag [#allocation10], 1
    %14 = vsyncpa %s13, 0
    %15 = vsyncpa [#allocation8], 0
    %s16 = scalar_lea.sflag [#allocation8], 1
    %17 = vsyncpa %s16, 0
    loop: start=0, step=1, limit=6
    $region2: #{tpu_custom_call.1} parent=1 // loop_pre_header
      _
    $region3: #{tpu_custom_call.1} parent=1 // loop_header
      %s19 = sphi 0, %s23
      %p20 = scmp.ge.s32.totalorder %s19, 6
      %s26 = sphi 0, %s38
      %s27 = sphi 0, %s34
      %s28 = sphi 0, %s26
      %s29 = sphi 0, %s27
      %s30 = sphi 0, %s28
      %s31 = sphi 0, %s29
      %s39 = sphi 0, %s39
      %s41 = sphi 0, %s39
      %s42 = sphi 0, %s41
      %s56 = sphi 0, %s42
      %s64 = sphi 0, %s66
      %s67 = sphi 0, %s64
      %s68 = sphi 0, %s67
      %s84 = sphi 0, %s68
      %s92 = sphi 0, %s94
      %s95 = sphi 0, %s92
      %s96 = sphi 0, %s95
      %s112 = sphi 0, %s96
      %s118 = sphi 0, %s120
      %s121 = sphi 0, %s118
      %s122 = sphi 0, %s121
      %s138 = sphi 0, %s122
    $region4: #{tpu_custom_call.1} parent=1 // loop_header_branch
      %22 = sbr.rel (%p20) target = $region8
    $region5: #{tpu_custom_call.1} parent=1 // loop_body
      %s24 = ssub.s32 %s19, 1
      %s25 = ssub.s32 %s19, 2
      %s32 = sadd.s32 1, %s27
      %p33 = scmp.ge.s32.totalorder %s32, 2
      %s34 = scalar_select %p33, 0, %s32
      %s35 = sadd.s32 1, %s26
      %s36 = scalar_select %p33, %s35, %s26
      %p37 = scmp.ge.s32.totalorder %s36, 2
      %s38 = scalar_select %p37, 0, %s36
      %s40 = sadd.s32 %s39, 1
      %p43 = scmp.eq.s32.totalorder %s19, 3
      %p44 = scmp.ne.s32.totalorder %s39, %s41
      %p45 = scmp.eq.s32.totalorder %s19, 0
      %p46 = por %p44, %p45
      %p47 = scmp.ne.s32.totalorder %s39, %s41
      %p48 = scmp.eq.s32.totalorder %s24, 3
      %p49 = por %p47, %p48
      %p50 = scmp.ne.s32.totalorder %s41, %s42
      %p51 = scmp.eq.s32.totalorder %s24, 0
      %p52 = por %p50, %p51
      %p53 = scmp.ne.s32.totalorder %s41, %s42
      %p54 = scmp.eq.s32.totalorder %s25, 3
      %p55 = por %p53, %p54
      %p57 = scmp.ne.s32.totalorder %s42, %s56
      %p58 = scmp.eq.s32.totalorder %s25, 0
      %p59 = por %p57, %p58
      %s60 = ssub.s32 %s26, %s38
      %s61 = ssub.s32 %s27, %s34
      %s62 = sor.u32 %s60, %s61
      %p63 = scmp.eq.s32.totalorder %s62, 0
      %s65 = sadd.s32 %s64, 1
      %s66 = scalar_select %p63, %s64, %s65
      %p69 = pneg %p63
      %p70 = scmp.eq.s32.totalorder %s19, 3
      %p71 = por %p69, %p70
      %p72 = scmp.ne.s32.totalorder %s64, %s67
      %p73 = scmp.eq.s32.totalorder %s19, 0
      %p74 = por %p72, %p73
      %p75 = scmp.ne.s32.totalorder %s64, %s67
      %p76 = scmp.eq.s32.totalorder %s24, 3
      %p77 = por %p75, %p76
      %p78 = scmp.ne.s32.totalorder %s67, %s68
      %p79 = scmp.eq.s32.totalorder %s24, 0
      %p80 = por %p78, %p79
      %p81 = scmp.ne.s32.totalorder %s67, %s68
      %p82 = scmp.eq.s32.totalorder %s25, 3
      %p83 = por %p81, %p82
      %p85 = scmp.ne.s32.totalorder %s68, %s84
      %p86 = scmp.eq.s32.totalorder %s25, 0
      %p87 = por %p85, %p86
      %s88 = ssub.s32 %s26, %s38
      %s89 = ssub.s32 %s27, %s34
      %s90 = sor.u32 %s88, %s89
      %p91 = scmp.eq.s32.totalorder %s90, 0
      %s93 = sadd.s32 %s92, 1
      %s94 = scalar_select %p91, %s92, %s93
      %p97 = pneg %p91
      %p98 = scmp.eq.s32.totalorder %s19, 3
      %p99 = por %p97, %p98
      %p100 = scmp.ne.s32.totalorder %s92, %s95
      %p101 = scmp.eq.s32.totalorder %s19, 0
      %p102 = por %p100, %p101
      %p103 = scmp.ne.s32.totalorder %s92, %s95
      %p104 = scmp.eq.s32.totalorder %s24, 3
      %p105 = por %p103, %p104
      %p106 = scmp.ne.s32.totalorder %s95, %s96
      %p107 = scmp.eq.s32.totalorder %s24, 0
      %p108 = por %p106, %p107
      %p109 = scmp.ne.s32.totalorder %s95, %s96
      %p110 = scmp.eq.s32.totalorder %s25, 3
      %p111 = por %p109, %p110
      %p113 = scmp.ne.s32.totalorder %s96, %s112
      %p114 = scmp.eq.s32.totalorder %s25, 0
      %p115 = por %p113, %p114
      %s116 = ssub.s32 %s26, %s38
      %p117 = scmp.eq.s32.totalorder %s116, 0
      %s119 = sadd.s32 %s118, 1
      %s120 = scalar_select %p117, %s118, %s119
      %p123 = pneg %p117
      %p124 = scmp.eq.s32.totalorder %s19, 3
      %p125 = por %p123, %p124
      %p126 = scmp.ne.s32.totalorder %s118, %s121
      %p127 = scmp.eq.s32.totalorder %s19, 0
      %p128 = por %p126, %p127
      %p129 = scmp.ne.s32.totalorder %s118, %s121
      %p130 = scmp.eq.s32.totalorder %s24, 3
      %p131 = por %p129, %p130
      %p132 = scmp.ne.s32.totalorder %s121, %s122
      %p133 = scmp.eq.s32.totalorder %s24, 0
      %p134 = por %p132, %p133
      %p135 = scmp.ne.s32.totalorder %s121, %s122
      %p136 = scmp.eq.s32.totalorder %s25, 3
      %p137 = por %p135, %p136
      %p139 = scmp.ne.s32.totalorder %s122, %s138
      %p140 = scmp.eq.s32.totalorder %s25, 0
      %p141 = por %p139, %p140
      %p142 = scmp.le.s32.totalorder 1, %s19
      %p143 = scmp.lt.s32.totalorder %s19, 5
      %p144 = pnand %p142, %p143
      %p145 = pneg %p144
      // Predicated region
      $region9: #{tpu_custom_call.1} parent=5 // pred_check
        _
      $region10: #{tpu_custom_call.1} parent=5 // pred_check_branch
        %147 = sbr.rel (%p144) target = $region12
      $region11: #{tpu_custom_call.1} parent=5 // pred_region
        %s148 = ssub.s32 %s19, 1
        // Predicated region
        $region13: #{tpu_custom_call.1} parent=11 // pred_check
          %p149 = pneg %p52
        $region14: #{tpu_custom_call.1} parent=11 // pred_check_branch
          %151 = sbr.rel (%p149) target = $region16
        $region15: #{tpu_custom_call.1} parent=11 // pred_region
          _
        $region16: #{tpu_custom_call.1} parent=11 // pred_fallthru
          _
      $region12: #{tpu_custom_call.1} parent=5 // pred_fallthru
        _
      %p152 = scmp.lt.s32.totalorder %s19, 4
      // Predicated region
      $region17: #{tpu_custom_call.1} parent=5 // pred_check
        %p153 = pneg %p152
      $region18: #{tpu_custom_call.1} parent=5 // pred_check_branch
        %155 = sbr.rel (%p153) target = $region20
      $region19: #{tpu_custom_call.1} parent=5 // pred_region
        // Predicated region
        $region21: #{tpu_custom_call.1} parent=19 // pred_check
          %p156 = pneg %p74
        $region22: #{tpu_custom_call.1} parent=19 // pred_check_branch
          %158 = sbr.rel (%p156) target = $region24
        $region23: #{tpu_custom_call.1} parent=19 // pred_region
          %s159 = sand.u32 %s64, 1
          %s160 = scalar_lea.sflag [#allocation7], %s159
          %s161 = sand.u32 %s64, 1
          %s162 = smul.addr %s161, 32
          %s163 = scalar_lea.vmem [#allocation6], %s162
          %s165 = ssub.s32 512, 512
          %166 = vsyncadd %s160, %s165
          %s167 = smul.addr %s26, 8
          %s168 = sadd.s32 %s27, %s167
          %s169 = smul.addr %s168, 128
          %s170 = scalar_lea.hbm %s1, %s169
          %s171 = sshll.u32 %s163, 4
          %s172 = int_to_ptr.vmem [resolvable:$true] %s171
          %177 = dma.hbm_to_vmem [thread:$0]  %s170, 512, %s172, %s160, 256, 128, 8
        $region24: #{tpu_custom_call.1} parent=19 // pred_fallthru
          _
        // Predicated region
        $region25: #{tpu_custom_call.1} parent=19 // pred_check
          %p178 = pneg %p102
        $region26: #{tpu_custom_call.1} parent=19 // pred_check_branch
          %180 = sbr.rel (%p178) target = $region28
        $region27: #{tpu_custom_call.1} parent=19 // pred_region
          %s181 = sand.u32 %s92, 1
          %s182 = scalar_lea.sflag [#allocation10], %s181
          %s183 = sand.u32 %s92, 1
          %s184 = smul.addr %s183, 32
          %s185 = scalar_lea.vmem [#allocation9], %s184
          %s187 = ssub.s32 512, 512
          %188 = vsyncadd %s182, %s187
          %s189 = smul.addr %s26, 8
          %s190 = sadd.s32 %s27, %s189
          %s191 = smul.addr %s190, 128
          %s192 = scalar_lea.hbm %s2, %s191
          %s193 = sshll.u32 %s185, 4
          %s194 = int_to_ptr.vmem [resolvable:$true] %s193
          %199 = dma.hbm_to_vmem [thread:$0]  %s192, 512, %s194, %s182, 256, 128, 8
        $region28: #{tpu_custom_call.1} parent=19 // pred_fallthru
          _
      $region20: #{tpu_custom_call.1} parent=5 // pred_fallthru
        _
      %p200 = scmp.le.s32.totalorder 1, %s19
      %p201 = scmp.lt.s32.totalorder %s19, 5
      %p202 = pnand %p200, %p201
      %p203 = pneg %p202
      // Predicated region
      $region29: #{tpu_custom_call.1} parent=5 // pred_check
        _
      $region30: #{tpu_custom_call.1} parent=5 // pred_check_branch
        %205 = sbr.rel (%p202) target = $region32
      $region31: #{tpu_custom_call.1} parent=5 // pred_region
        %s206 = ssub.s32 %s19, 1
        %s207 = sand.u32 %s67, 1
        %s208 = scalar_lea.sflag [#allocation7], %s207
        %s209 = sand.u32 %s67, 1
        %s210 = smul.addr %s209, 32
        %s211 = scalar_lea.vmem [#allocation6], %s210
        // Predicated region
        $region33: #{tpu_custom_call.1} parent=31 // pred_check
          %p212 = pneg %p80
        $region34: #{tpu_custom_call.1} parent=31 // pred_check_branch
          %214 = sbr.rel (%p212) target = $region36
        $region35: #{tpu_custom_call.1} parent=31 // pred_region
          %215 = dma.done %s208, 512
        $region36: #{tpu_custom_call.1} parent=31 // pred_fallthru
          _
        %s216 = sand.u32 %s95, 1
        %s217 = scalar_lea.sflag [#allocation10], %s216
        %s218 = sand.u32 %s95, 1
        %s219 = smul.addr %s218, 32
        %s220 = scalar_lea.vmem [#allocation9], %s219
        // Predicated region
        $region37: #{tpu_custom_call.1} parent=31 // pred_check
          %p221 = pneg %p108
        $region38: #{tpu_custom_call.1} parent=31 // pred_check_branch
          %223 = sbr.rel (%p221) target = $region40
        $region39: #{tpu_custom_call.1} parent=31 // pred_region
          %224 = dma.done %s217, 512
        $region40: #{tpu_custom_call.1} parent=31 // pred_fallthru
          _
        %p225 = pneg %p52
        %p226 = pneg %p49
        %s227 = sand.u32 %s67, 1
        %s228 = scalar_lea.sflag [#allocation7], %s227
        %s229 = sand.u32 %s67, 1
        %s230 = smul.addr %s229, 32
        %s231 = scalar_lea.vmem [#allocation6], %s230
        %p232 = pneg %p80
        %p233 = pneg %p77
        %s234 = sand.u32 %s95, 1
        %s235 = scalar_lea.sflag [#allocation10], %s234
        %s236 = sand.u32 %s95, 1
        %s237 = smul.addr %s236, 32
        %s238 = scalar_lea.vmem [#allocation9], %s237
        %p239 = pneg %p108
        %p240 = pneg %p105
        %p241 = pneg %p134
        %p242 = pneg %p131
        %s243 = sand.u32 %s121, 1
        %s244 = scalar_lea.sflag [#allocation8], %s243
        %s245 = sand.u32 %s121, 1
        %s246 = scalar_lea.vmem [#allocation11], %s245
        %v247 = vld [vmem:[%s211] sm:$0xff]
        %v248 = vld [vmem:[%s211 + $0x8] sm:$0xff]
        %v249 = vld [vmem:[%s211 + $0x10] sm:$0xff]
        %v250 = vld [vmem:[%s211 + $0x18] sm:$0xff]
        %vm251 = vcmask 130048
        %v252 = vsel %vm251, %v247, 0.0
        %v253 = vsel %vm251, %v248, 0.0
        %v254 = vadd.f32 %v252, %v253
        %v255 = vsel %vm251, %v249, 0.0
        %v256 = vadd.f32 %v254, %v255
        %v257 = vsel %vm251, %v250, 0.0
        %v258 = vadd.f32 %v256, %v257
        %v259 = vmul.f32 %v258, 0.25
        %v260 = vld [vmem:[%s220] sm:$0xff]
        %v261 = vld [vmem:[%s220 + $0x8] sm:$0xff]
        %v262 = vld [vmem:[%s220 + $0x10] sm:$0xff]
        %v263 = vld [vmem:[%s220 + $0x18] sm:$0xff]
        %v264 = vsel %vm251, %v260, 0.0
        %v265 = vsel %vm251, %v261, 0.0
        %v266 = vadd.f32 %v264, %v265
        %v267 = vsel %vm251, %v262, 0.0
        %v268 = vadd.f32 %v266, %v267
        %v269 = vsel %vm251, %v263, 0.0
        %v270 = vadd.f32 %v268, %v269
        %v271 = vmul.f32 %v270, 0.25
        %s272 = sld [smem:[#allocation5]]
        %p273 = scmp.eq.s32.totalorder %s29, 0
        // Predicated region
        $region41: #{tpu_custom_call.1} parent=31 // pred_check
          %p274 = pneg %p273
        $region42: #{tpu_custom_call.1} parent=31 // pred_check_branch
          %276 = sbr.rel (%p274) target = $region44
        $region43: #{tpu_custom_call.1} parent=31 // pred_region
          %277 = vst [vmem:[#allocation4] sm:$0x1] 0.0
          %vm278 = vcmask 122880
          %279 = vst.msk [vmem:[#allocation2] sm:$0x1] %vm278, %v259
          %280 = vst.msk [vmem:[#allocation3] sm:$0x1] %vm278, %v271
        $region44: #{tpu_custom_call.1} parent=31 // pred_fallthru
          _
        %v281 = vlaneseq
        %v282 = vand.u32 %v281, 127
        %284 = vrot.lane.b32.xlu0 %v259, 1
        %v285 = vpop.permute.xlu0 %284
        %v287 = vsub.f32 %v259, %v285
        %289 = vrot.lane.b32.xlu0 %v271, 1
        %v290 = vpop.permute.xlu0 %289
        %v292 = vsub.f32 %v271, %v290
        %v293 = vand.u32 2147483647, %v292
        %v294 = vstv %s272
        %v295 = vmul.f32 %v293, %v294
        %v296 = vmul.f32 %v295, 1.442695
        %v297 = vpow.pop %v296
        %v298 = vand.u32 2147483647, %v287
        %v299 = vmul.f32 %v297, %v298
        %301 = vrot.lane.b32.xlu0 %v299, 127
        %v302 = vpop.permute.xlu0 %301
        %vm304 = vcmask 121856
        %v305 = vsel %vm304, %v302, 0.0
        %306 = vadd.xlane.f32.xlu0 %v305
        %v307 = vpop.xlane.xlu0 %306
        %v308 = vrot.slane %v307, 4
        %v309 = vadd.f32 %v307, %v308
        %v310 = vrot.slane %v309, 2
        %v311 = vadd.f32 %v309, %v310
        %v312 = vrot.slane %v311, 1
        %v313 = vadd.f32 %v311, %v312
        %s314 = vtos %v313
        %v315 = vrot.slane %v259, 7
        %v317 = vsub.f32 %v259, %v315
        %v318 = vrot.slane %v271, 7
        %v320 = vsub.f32 %v271, %v318
        %v321 = vand.u32 2147483647, %v320
        %v322 = vmul.f32 %v321, %v294
        %v323 = vmul.f32 %v322, 1.442695
        %v324 = vpow.pop %v323
        %v325 = vand.u32 2147483647, %v317
        %v326 = vmul.f32 %v324, %v325
        %v328 = vrot.slane %v326, 1
        %vm330 = vcmask 129024
        %v331 = vsel %vm330, %v328, 0.0
        %332 = vadd.xlane.f32.xlu0 %v331
        %v333 = vpop.xlane.xlu0 %332
        %v334 = vrot.slane %v333, 4
        %v335 = vadd.f32 %v333, %v334
        %v336 = vrot.slane %v335, 2
        %v337 = vadd.f32 %v335, %v336
        %v338 = vrot.slane %v337, 1
        %v339 = vadd.f32 %v337, %v338
        %s340 = vtos %v339
        %v341 = vld [vmem:[#allocation2] sm:$0x1]
        %v342 = vsub.f32 %v259, %v341
        %v343 = vld [vmem:[#allocation3] sm:$0x1]
        %v344 = vsub.f32 %v271, %v343
        %v345 = vand.u32 2147483647, %v344
        %v346 = vmul.f32 %v345, %v294
        %v347 = vmul.f32 %v346, 1.442695
        %v348 = vpow.pop %v347
        %v349 = vand.u32 2147483647, %v342
        %v350 = vmul.f32 %v348, %v349
        %vm351 = vcmask 122880
        %v352 = vsel %vm351, %v350, 0.0
        %353 = vadd.xlane.f32.xlu0 %v352
        %v354 = vpop.xlane.xlu0 %353
        %v355 = vrot.slane %v354, 4
        %v356 = vadd.f32 %v354, %v355
        %v357 = vrot.slane %v356, 2
        %v358 = vadd.f32 %v356, %v357
        %v359 = vrot.slane %v358, 1
        %v360 = vadd.f32 %v358, %v359
        %s361 = vtos %v360
        %s362 = sadd.f32 %s340, %s361
        %v363 = vld [vmem:[#allocation4] sm:$0x1]
        %vm364 = vcmp.eq.s32.totalorder %v282, 0
        %vm365 = vcmp.eq.s32.totalorder %v282, 1
        %v366 = vstv %s362
        %v367 = vsel %vm365, %v366, 0.0
        %v368 = vstv %s314
        %v369 = vsel %vm364, %v368, %v367
        %v370 = vadd.f32 %v363, %v369
        %371 = vst [vmem:[#allocation4] sm:$0x1] %v370
        %vm372 = vcmask 130055
        %373 = vst.msk [vmem:[#allocation2 - $0x7] sm:$0x80] %vm372, %v259
        %374 = vst.msk [vmem:[#allocation3 - $0x7] sm:$0x80] %vm372, %v271
        %p375 = scmp.eq.s32.totalorder %s29, 1
        // Predicated region
        $region45: #{tpu_custom_call.1} parent=31 // pred_check
          %p376 = pneg %p375
        $region46: #{tpu_custom_call.1} parent=31 // pred_check_branch
          %378 = sbr.rel (%p376) target = $region48
        $region47: #{tpu_custom_call.1} parent=31 // pred_region
          %v379 = vld [vmem:[#allocation4] sm:$0x1]
          %380 = vst [vmem:[%s246] sm:$0x1] %v379
        $region48: #{tpu_custom_call.1} parent=31 // pred_fallthru
          _
        %s381 = sand.u32 %s121, 1
        %s382 = scalar_lea.sflag [#allocation8], %s381
        %s383 = sand.u32 %s121, 1
        %s384 = scalar_lea.vmem [#allocation11], %s383
        // Predicated region
        $region49: #{tpu_custom_call.1} parent=31 // pred_check
          %p385 = pneg %p131
        $region50: #{tpu_custom_call.1} parent=31 // pred_check_branch
          %387 = sbr.rel (%p385) target = $region52
        $region51: #{tpu_custom_call.1} parent=31 // pred_region
          %s389 = ssub.s32 16, 16
          %390 = vsyncadd %s382, %s389
          %s391 = smul.addr %s28, 16
          %s392 = scalar_lea.hbm %s3, %s391
          %s394 = sshll.u32 %s384, 4
          %s395 = int_to_ptr.vmem [resolvable:$true] %s394
          %397 = dma.vmem_to_hbm [thread:$0]  %s395, 16, %s392, %s382
        $region52: #{tpu_custom_call.1} parent=31 // pred_fallthru
          _
      $region32: #{tpu_custom_call.1} parent=5 // pred_fallthru
        _
      %p398 = scmp.le.s32.totalorder 2, %s19
      // Predicated region
      $region53: #{tpu_custom_call.1} parent=5 // pred_check
        %p399 = pneg %p398
      $region54: #{tpu_custom_call.1} parent=5 // pred_check_branch
        %401 = sbr.rel (%p399) target = $region56
      $region55: #{tpu_custom_call.1} parent=5 // pred_region
        %s402 = ssub.s32 %s19, 2
        // Predicated region
        $region57: #{tpu_custom_call.1} parent=55 // pred_check
          %p403 = pneg %p137
        $region58: #{tpu_custom_call.1} parent=55 // pred_check_branch
          %405 = sbr.rel (%p403) target = $region60
        $region59: #{tpu_custom_call.1} parent=55 // pred_region
          %s406 = sand.u32 %s122, 1
          %s407 = scalar_lea.sflag [#allocation8], %s406
          %s408 = sand.u32 %s122, 1
          %s409 = scalar_lea.vmem [#allocation11], %s408
          %410 = dma.done %s407, 16
        $region60: #{tpu_custom_call.1} parent=55 // pred_fallthru
          _
      $region56: #{tpu_custom_call.1} parent=5 // pred_fallthru
        _
    $region6: #{tpu_custom_call.1} parent=1 // loop_footer
      %s23 = sadd.s32 1, %s19
    $region7: #{tpu_custom_call.1} parent=1 // loop_footer_branch
      %18 = sbr.rel target = $region3
    $region8: #{tpu_custom_call.1} parent=1 // loop_exit
      _
    %411 = vsyncpa [#allocation7], 1
    %s412 = scalar_lea.sflag [#allocation7], 1
    %413 = vsyncpa %s412, 1
    %414 = vsyncpa [#allocation10], 1
    %s415 = scalar_lea.sflag [#allocation10], 1
    %416 = vsyncpa %s415, 1
    %417 = vsyncpa [#allocation8], 1
    %s418 = scalar_lea.sflag [#allocation8], 1
    %419 = vsyncpa %s418, 1

</llo_original>
